<compile_context>
chip_gen: v6e
topology: v6e:2x2x1
jax: 0.10.0
libtpu: 0.0.40
codegen_flags: <defaults>
</compile_context>

<pallas_src>
import functools

import jax
import jax.numpy as jnp
import numpy as np
from jax import lax
from jax.experimental import pallas as pl
from jax.experimental.pallas import tpu as pltpu

_VMEM_LIMIT = 32 * 1024 * 1024


def _round_up(x, m):
    return (x + m - 1) // m * m


# ---------------------------------------------------------------------------
# Kernel 1 (MXU): y = [relu](x @ W + b) [+ residual]
# Used for every pointwise / 1x1 / skip conv (BN pre-folded), the im2col'd
# dense stem convs and the final Linear.
# ---------------------------------------------------------------------------
@functools.lru_cache(maxsize=None)
def _build_matmul(mp, k, n, tm, relu, has_res):
    def kernel(x_ref, w_ref, b_ref, *rest):
        if has_res:
            r_ref, o_ref = rest
        else:
            (o_ref,) = rest
        acc = jnp.dot(x_ref[...].astype(jnp.bfloat16), w_ref[...],
                      preferred_element_type=jnp.float32)
        acc = acc + b_ref[...]
        if relu:
            acc = jnp.maximum(acc, 0.0)
        if has_res:
            acc = acc + r_ref[...]
        o_ref[...] = acc

    in_specs = [
        pl.BlockSpec((tm, k), lambda i: (i, 0)),
        pl.BlockSpec((k, n), lambda i: (0, 0)),
        pl.BlockSpec((1, n), lambda i: (0, 0)),
    ]
    if has_res:
        in_specs.append(pl.BlockSpec((tm, n), lambda i: (i, 0)))

    fn = pl.pallas_call(
        kernel,
        grid_spec=pltpu.PrefetchScalarGridSpec(
            num_scalar_prefetch=0,
            grid=(mp // tm,),
            in_specs=in_specs,
            out_specs=pl.BlockSpec((tm, n), lambda i: (i, 0))),
        out_shape=jax.ShapeDtypeStruct((mp, n), jnp.float32),
        compiler_params=pltpu.CompilerParams(
            dimension_semantics=("parallel",),
            vmem_limit_bytes=_VMEM_LIMIT))
    return jax.jit(fn)


def matmul_affine(x, w, b, *, relu=False, residual=None):
    """x:(M,K) f32, w:(K,N) f32 (eval-BN pre-folded), b:(N,) f32."""
    m, k = x.shape
    n = w.shape[1]
    m0, n0 = m, n

    # Layout-friendly padding: K to multiple of 8, N up to >=128 so output
    # stores are unmasked, M to a multiple of the row tile.
    kp = _round_up(k, 8)
    if kp != k:
        x = jnp.pad(x, ((0, 0), (0, kp - k)))
        w = jnp.pad(w, ((0, kp - k), (0, 0)))
        k = kp
    if n < 128:
        w = jnp.pad(w, ((0, 0), (0, 128 - n)))
        b = jnp.pad(b, (0, 128 - n))
        if residual is not None:
            residual = jnp.pad(residual, ((0, 0), (0, 128 - n)))
        n = 128
    mp = _round_up(m, 8)
    tm = mp if mp <= 512 else 256
    mp = _round_up(m, tm)
    if mp != m:
        x = jnp.pad(x, ((0, mp - m), (0, 0)))
        if residual is not None:
            residual = jnp.pad(residual, ((0, mp - m), (0, 0)))

    fn = _build_matmul(mp, k, n, tm, bool(relu), residual is not None)
    args = [x, w.astype(jnp.bfloat16), b.reshape(1, n)]
    if residual is not None:
        args.append(residual)
    out = fn(*args)
    return out[:m0, :n0]


def pointwise_conv(x, w, b, *, relu=False, residual=None):
    """1x1 conv (+ folded eval-BN) on NHWC x; optional fused residual add."""
    bsz, h, ww, c = x.shape
    n = w.shape[1]
    res2 = residual.reshape(bsz * h * ww, n) if residual is not None else None
    y = matmul_affine(x.reshape(bsz * h * ww, c), w, b, relu=relu, residual=res2)
    return y.reshape(bsz, h, ww, n)


def conv2d_im2col(x, w, b, *, stride, relu):
    """Dense kxk VALID conv (+ folded eval-BN) via im2col + Pallas matmul.
    w: (kh, kw, Cin, Cout) f32 (folded); b: (Cout,)."""
    bsz, h, ww, c = x.shape
    kh, kw, _, n = w.shape
    ho = (h - kh) // stride + 1
    wo = (ww - kw) // stride + 1
    cols = []
    for dh in range(kh):
        for dw in range(kw):
            cols.append(x[:, dh:dh + stride * (ho - 1) + 1:stride,
                          dw:dw + stride * (wo - 1) + 1:stride, :])
    patches = jnp.concatenate(cols, axis=-1)            # (B, Ho, Wo, kh*kw*C)
    y = matmul_affine(patches.reshape(bsz * ho * wo, kh * kw * c),
                      w.reshape(kh * kw * c, n), b, relu=relu)
    return y.reshape(bsz, ho, wo, n)


# ---------------------------------------------------------------------------
# Kernel 2 (VPU): depthwise 3x3 conv, stride 1, pad 1, optional fused pre-ReLU
# ---------------------------------------------------------------------------
@functools.lru_cache(maxsize=None)
def _build_depthwise(b, h, w, c, pre_relu):
    def kernel(x_ref, w_ref, o_ref):
        x = x_ref[0]                                    # (H+2, W+2, C)
        if pre_relu:
            x = jnp.maximum(x, 0.0)
        kv = w_ref[...]                                 # (9, C)
        acc = jnp.zeros((h, w, c), jnp.float32)
        for dh in range(3):
            for dw in range(3):
                idx = 3 * dh + dw
                tap = x[dh:dh + h, dw:dw + w, :]
                acc = acc + tap * kv[idx:idx + 1].reshape(1, 1, c)
        o_ref[0] = acc

    fn = pl.pallas_call(
        kernel,
        grid_spec=pltpu.PrefetchScalarGridSpec(
            num_scalar_prefetch=0,
            grid=(b,),
            in_specs=[pl.BlockSpec((1, h + 2, w + 2, c),
                                   lambda i: (i, 0, 0, 0)),
                      pl.BlockSpec((9, c), lambda i: (0, 0))],
            out_specs=pl.BlockSpec((1, h, w, c), lambda i: (i, 0, 0, 0))),
        out_shape=jax.ShapeDtypeStruct((b, h, w, c), jnp.float32),
        compiler_params=pltpu.CompilerParams(
            dimension_semantics=("parallel",),
            vmem_limit_bytes=_VMEM_LIMIT))
    return jax.jit(fn)


def depthwise_conv3x3(x, w33, *, pre_relu):
    """Depthwise 3x3 / stride 1 / pad 1 (no bias), optional fused pre-ReLU."""
    bsz, h, w, c = x.shape
    xp = jnp.pad(x, ((0, 0), (1, 1), (1, 1), (0, 0)))
    return _build_depthwise(bsz, h, w, c, bool(pre_relu))(xp, w33.reshape(9, c))


# ---------------------------------------------------------------------------
# Kernel 3 (VPU): MaxPool2d(3, stride=2, pad=1) with optional fused skip add
# The 9 strided window taps are gathered lane-densely in the wrapper (pure
# data movement); the kernel is a max-reduce (+ residual add).
# ---------------------------------------------------------------------------
@functools.lru_cache(maxsize=None)
def _build_maxpool(b, ho, wo, c, has_skip):
    def kernel(t_ref, *rest):
        if has_skip:
            s_ref, o_ref = rest
        else:
            (o_ref,) = rest
        taps = t_ref[0].reshape(9, ho, wo, c)
        m = jnp.max(taps, axis=0)
        if has_skip:
            m = m + s_ref[0]
        o_ref[0] = m

    in_specs = [pl.BlockSpec((1, 9 * ho, wo, c), lambda i: (i, 0, 0, 0))]
    if has_skip:
        in_specs.append(pl.BlockSpec((1, ho, wo, c), lambda i: (i, 0, 0, 0)))
    fn = pl.pallas_call(
        kernel,
        grid_spec=pltpu.PrefetchScalarGridSpec(
            num_scalar_prefetch=0,
            grid=(b,),
            in_specs=in_specs,
            out_specs=pl.BlockSpec((1, ho, wo, c), lambda i: (i, 0, 0, 0))),
        out_shape=jax.ShapeDtypeStruct((b, ho, wo, c), jnp.float32),
        compiler_params=pltpu.CompilerParams(
            dimension_semantics=("parallel",),
            vmem_limit_bytes=_VMEM_LIMIT))
    return jax.jit(fn)


def maxpool3x3_s2(x, skip=None):
    bsz, h, w, c = x.shape
    ho = (h - 1) // 2 + 1
    wo = (w - 1) // 2 + 1
    xp = jnp.pad(x, ((0, 0), (1, 1), (1, 1), (0, 0)),
                 constant_values=-jnp.inf)
    taps = [xp[:, dh:dh + 2 * (ho - 1) + 1:2, dw:dw + 2 * (wo - 1) + 1:2, :]
            for dh in range(3) for dw in range(3)]
    t = jnp.stack(taps, axis=1).reshape(bsz, 9 * ho, wo, c)
    fn = _build_maxpool(bsz, ho, wo, c, skip is not None)
    return fn(t, skip) if skip is not None else fn(t)


# ---------------------------------------------------------------------------
# Kernel 4 (VPU): ReLU + global average pool  (logits head, pre-fc)
# ---------------------------------------------------------------------------
@functools.lru_cache(maxsize=None)
def _build_relu_gap(b, hw, c):
    inv = 1.0 / hw

    def kernel(x_ref, o_ref):
        x = jnp.maximum(x_ref[...], 0.0)                # (B, H*W, C)
        o_ref[...] = jnp.sum(x, axis=1) * inv

    fn = pl.pallas_call(
        kernel,
        grid_spec=pltpu.PrefetchScalarGridSpec(
            num_scalar_prefetch=0,
            grid=(1,),
            in_specs=[pl.BlockSpec((b, hw, c), lambda i: (0, 0, 0))],
            out_specs=pl.BlockSpec((b, c), lambda i: (0, 0))),
        out_shape=jax.ShapeDtypeStruct((b, c), jnp.float32),
        compiler_params=pltpu.CompilerParams(
            dimension_semantics=("arbitrary",),
            vmem_limit_bytes=_VMEM_LIMIT))
    return jax.jit(fn)


def relu_global_avg_pool(x):
    bsz, h, w, c = x.shape
    return _build_relu_gap(bsz, h * w, c)(x.reshape(bsz, h * w, c))


# ---------------------------------------------------------------------------
# Xception forward (Pallas path)
# ---------------------------------------------------------------------------
def block_forward(x, bp):
    inp = x
    stride = bp['stride']
    if bp['skip_w'] is not None:
        s_in = inp[:, ::stride, ::stride, :] if stride != 1 else inp
        skip = pointwise_conv(s_in, bp['skip_w'], bp['skip_b'])
    else:
        skip = inp
    n_units = len(bp['units'])
    for i, u in enumerate(bp['units']):
        fuse_res = (i == n_units - 1) and stride == 1   # residual fused in matmul
        x = depthwise_conv3x3(x, u['dw'], pre_relu=u['pre_relu'])
        x = pointwise_conv(x, u['pw'], u['pb'],
                           residual=skip if fuse_res else None)
    if stride != 1:
        x = maxpool3x3_s2(x, skip=skip)                 # residual fused in pool
    return x


def xception_forward(x, params):
    # stem
    x = conv2d_im2col(x, params['conv1_w'], params['conv1_b'], stride=2, relu=True)
    x = conv2d_im2col(x, params['conv2_w'], params['conv2_b'], stride=1, relu=True)
    # blocks 1..12
    for bp in params['blocks']:
        x = block_forward(x, bp)
    # conv3 (SeparableConv2d) + bn3 + relu
    x = depthwise_conv3x3(x, params['conv3_dw'], pre_relu=False)
    x = pointwise_conv(x, params['conv3_pw'], params['conv3_pb'], relu=True)
    # conv4 (SeparableConv2d) + bn4
    x = depthwise_conv3x3(x, params['conv4_dw'], pre_relu=False)
    x = pointwise_conv(x, params['conv4_pw'], params['conv4_pb'], relu=False)
    # logits: relu -> adaptive_avg_pool2d(1,1) -> flatten -> (dropout: id) -> fc
    y = relu_global_avg_pool(x)                                     # (B, 2048)
    logits = matmul_affine(y, params['fc_w'], params['fc_b'])       # (B, 1)
    return y, logits


# ---------------------------------------------------------------------------
# Parameters (eval-mode BatchNorm folded into per-channel (scale, shift))
# ---------------------------------------------------------------------------
def _fold_bn(key, c):
    k1, k2, k3, k4 = jax.random.split(key, 4)
    gamma = 1.0 + 0.1 * jax.random.normal(k1, (c,), jnp.float32)
    beta = 0.1 * jax.random.normal(k2, (c,), jnp.float32)
    mean = 0.1 * jax.random.normal(k3, (c,), jnp.float32)
    var = jnp.exp(0.1 * jax.random.normal(k4, (c,), jnp.float32))
    scale = gamma / jnp.sqrt(var + 1e-5)
    shift = beta - mean * scale
    return scale, shift


def _sepconv_bn_params(key, cin, cout):
    kd, kp, kb = jax.random.split(key, 3)
    dw = jax.random.normal(kd, (3, 3, cin), jnp.float32) * np.sqrt(2.0 / 9.0)
    pw = jax.random.normal(kp, (cin, cout), jnp.float32) * np.sqrt(1.0 / cin)
    scale, shift = _fold_bn(kb, cout)
    return dict(dw=dw, pw=pw * scale[None, :], pb=shift)


def _block_params(key, cin, cout, reps, stride, start_with_relu, grow_first):
    unit_io = []
    filt = cin
    if grow_first:
        unit_io.append((cin, cout))
        filt = cout
    for _ in range(reps - 1):
        unit_io.append((filt, filt))
    if not grow_first:
        unit_io.append((cin, cout))
    keys = jax.random.split(key, len(unit_io) + 1)
    units = []
    for i, (ci, co) in enumerate(unit_io):
        u = _sepconv_bn_params(keys[i], ci, co)
        u['pre_relu'] = bool(start_with_relu or i > 0)
        units.append(u)
    skip_w = skip_b = None
    if cout != cin or stride != 1:
        ks1, ks2 = jax.random.split(keys[-1])
        w = jax.random.normal(ks1, (cin, cout), jnp.float32) * np.sqrt(1.0 / cin)
        scale, shift = _fold_bn(ks2, cout)
        skip_w, skip_b = w * scale[None, :], shift
    return dict(units=units, skip_w=skip_w, skip_b=skip_b, stride=stride)


def init_params(key):
    ks = jax.random.split(key, 10)
    w1 = jax.random.normal(ks[0], (3, 3, 3, 32), jnp.float32) * np.sqrt(2.0 / 27.0)
    s1, b1 = _fold_bn(ks[1], 32)
    w2 = jax.random.normal(ks[2], (3, 3, 32, 64), jnp.float32) * np.sqrt(2.0 / 288.0)
    s2, b2 = _fold_bn(ks[3], 64)
    block_cfg = ([(64, 128, 2, 2, False, True),
                  (128, 256, 2, 2, True, True),
                  (256, 728, 2, 2, True, True)]
                 + [(728, 728, 3, 1, True, True)] * 8
                 + [(728, 1024, 2, 2, True, False)])
    bkeys = jax.random.split(ks[4], len(block_cfg))
    blocks = [_block_params(bk, *cfg) for bk, cfg in zip(bkeys, block_cfg)]
    c3 = _sepconv_bn_params(ks[5], 1024, 1536)
    c4 = _sepconv_bn_params(ks[6], 1536, 2048)
    fc_w = jax.random.normal(ks[7], (2048, 1), jnp.float32) * np.sqrt(1.0 / 2048.0)
    fc_b = 0.1 * jax.random.normal(ks[8], (1,), jnp.float32)
    return dict(
        conv1_w=w1 * s1[None, None, None, :], conv1_b=b1,
        conv2_w=w2 * s2[None, None, None, :], conv2_b=b2,
        blocks=blocks,
        conv3_dw=c3['dw'], conv3_pw=c3['pw'], conv3_pb=c3['pb'],
        conv4_dw=c4['dw'], conv4_pw=c4['pw'], conv4_pb=c4['pb'],
        fc_w=fc_w, fc_b=fc_b)


# ---------------------------------------------------------------------------
# Plain-JAX reference (f32, HIGHEST precision), mirrors the PyTorch forward
# ---------------------------------------------------------------------------
def reference_forward(x, params):
    hp = lax.Precision.HIGHEST

    def conv(v, w, stride):
        return lax.conv_general_dilated(
            v, w, (stride, stride), 'VALID',
            dimension_numbers=('NHWC', 'HWIO', 'NHWC'), precision=hp)

    def depthwise(v, w):
        c = v.shape[-1]
        return lax.conv_general_dilated(
            v, w[:, :, None, :], (1, 1), [(1, 1), (1, 1)],
            dimension_numbers=('NHWC', 'HWIO', 'NHWC'),
            feature_group_count=c, precision=hp)

    def pointwise(v, w, b):
        return jnp.einsum('bhwc,cd->bhwd', v, w, precision=hp) + b

    def maxpool(v):
        return lax.reduce_window(v, -jnp.inf, lax.max,
                                 (1, 3, 3, 1), (1, 2, 2, 1),
                                 [(0, 0), (1, 1), (1, 1), (0, 0)])

    relu = lambda v: jnp.maximum(v, 0.0)

    x = relu(conv(x, params['conv1_w'], 2) + params['conv1_b'])
    x = relu(conv(x, params['conv2_w'], 1) + params['conv2_b'])
    for bp in params['blocks']:
        inp = x
        for u in bp['units']:
            if u['pre_relu']:
                x = relu(x)
            x = depthwise(x, u['dw'])
            x = pointwise(x, u['pw'], u['pb'])
        if bp['stride'] != 1:
            x = maxpool(x)
        if bp['skip_w'] is not None:
            skip = conv(inp, bp['skip_w'][None, None], bp['stride']) + bp['skip_b']
        else:
            skip = inp
        x = x + skip
    x = depthwise(x, params['conv3_dw'])
    x = relu(pointwise(x, params['conv3_pw'], params['conv3_pb']))
    x = depthwise(x, params['conv4_dw'])
    x = pointwise(x, params['conv4_pw'], params['conv4_pb'])
    x = relu(x)
    y = jnp.mean(x, axis=(1, 2))
    logits = jnp.dot(y, params['fc_w'], precision=hp) + params['fc_b']
    return y, logits


if __name__ == "__main__":
    key = jax.random.PRNGKey(0)
    kx, kp = jax.random.split(key)
    B, H = 2, 64
    x_nchw = jax.random.normal(kx, (B, 3, H, H), jnp.float32)   # NCHW like PyTorch
    x = jnp.transpose(x_nchw, (0, 2, 3, 1))                     # NHWC (lane-dense C)
    params = init_params(kp)

    y, logits = xception_forward(x, params)
    y, logits = jax.block_until_ready((y, logits))

    ry, rlogits = reference_forward(x, params)
    for got, want in ((y, ry), (logits, rlogits)):
        g, w = np.asarray(got), np.asarray(want)
        scale = max(float(np.max(np.abs(w))), 1.0)
        # Tolerance sized for bf16 MXU operands vs the f32 reference across
        # ~37 chained matmuls of a deep random-weight network.
        np.testing.assert_allclose(g, w, rtol=5e-2, atol=5e-2 * scale)
    print("KERNEL_OK")
</pallas_src>

<mosaic_0001>
module attributes {stable_mosaic.version = 11 : i64} {
  func.func @kernel(%arg0: i32, %arg1: memref<256x32xf32, #tpu.memory_space<vmem>>, %arg2: memref<32x128xbf16, #tpu.memory_space<vmem>>, %arg3: memref<1x128xf32, #tpu.memory_space<vmem>>, %arg4: memref<256x128xf32, #tpu.memory_space<vmem>>) attributes {dimension_semantics = [#tpu.dimension_semantics<parallel>], iteration_bounds = array<i64: 8>, scalar_prefetch = 0 : i64, scratch_operands = 0 : i64, tpu.core_type = #tpu.core_type<tc>, window_params = [{transform_indices = @transform_0, window_bounds = array<i64: 256, 32>}, {pipeline_mode = #tpu.pipeline_mode<synchronous>, transform_indices = @transform_1, window_bounds = array<i64: 32, 128>}, {pipeline_mode = #tpu.pipeline_mode<synchronous>, transform_indices = @transform_2, window_bounds = array<i64: 1, 128>}, {transform_indices = @transform_3, window_bounds = array<i64: 256, 128>}]} {
    %c0 = arith.constant 0 : index
    %c0_0 = arith.constant 0 : index
    %0 = vector.load %arg1[%c0, %c0_0] : memref<256x32xf32, #tpu.memory_space<vmem>>, vector<256x32xf32>
    %1 = arith.truncf %0 : vector<256x32xf32> to vector<256x32xbf16>
    %c0_1 = arith.constant 0 : index
    %c0_2 = arith.constant 0 : index
    %2 = vector.load %arg2[%c0_1, %c0_2] : memref<32x128xbf16, #tpu.memory_space<vmem>>, vector<32x128xbf16>
    %cst = arith.constant dense<0.000000e+00> : vector<256x128xf32>
    %3 = tpu.matmul %1, %2, %cst {dimension_numbers = #tpu.dot_dimension_numbers<[1], [0], [0], [1], [0, 0, 1, 1], [], []>} : vector<256x32xbf16>, vector<32x128xbf16>, vector<256x128xf32> -> vector<256x128xf32>
    %c0_3 = arith.constant 0 : index
    %c0_4 = arith.constant 0 : index
    %4 = vector.load %arg3[%c0_3, %c0_4] : memref<1x128xf32, #tpu.memory_space<vmem>>, vector<1x128xf32>
    %5 = vector.broadcast %4 : vector<1x128xf32> to vector<256x128xf32>
    %6 = arith.addf %3, %5 : vector<256x128xf32>
    %cst_5 = arith.constant 0.000000e+00 : f32
    %7 = vector.broadcast %cst_5 : f32 to vector<256x128xf32>
    %8 = arith.maximumf %6, %7 : vector<256x128xf32>
    %c0_6 = arith.constant 0 : index
    %c0_7 = arith.constant 0 : index
    %9 = vector.load %arg4[%c0_6, %c0_7] : memref<256x128xf32, #tpu.memory_space<vmem>>, vector<256x128xf32>
    tpu.vector_store %arg4[%c0_6, %c0_7], %8 {strides = array<i32>} : memref<256x128xf32, #tpu.memory_space<vmem>>, vector<256x128xf32>,
    return
  }
  func.func @transform_0(%arg0: i32) -> (i32, i32) {
    %c0_i32 = arith.constant 0 : i32
    %c0_i32_0 = arith.constant 0 : i32
    return %arg0, %c0_i32 : i32, i32
  }
  func.func @transform_1(%arg0: i32) -> (i32, i32) {
    %c0_i32 = arith.constant 0 : i32
    %c0_i32_0 = arith.constant 0 : i32
    %c0_i32_1 = arith.constant 0 : i32
    return %c0_i32, %c0_i32_0 : i32, i32
  }
  func.func @transform_2(%arg0: i32) -> (i32, i32) {
    %c0_i32 = arith.constant 0 : i32
    %c0_i32_0 = arith.constant 0 : i32
    %c0_i32_1 = arith.constant 0 : i32
    return %c0_i32, %c0_i32_0 : i32, i32
  }
  func.func @transform_3(%arg0: i32) -> (i32, i32) {
    %c0_i32 = arith.constant 0 : i32
    %c0_i32_0 = arith.constant 0 : i32
    return %arg0, %c0_i32 : i32, i32
  }
}

</mosaic_0001>

<llo_original>
// kernel: tpu_custom_call.1
$region0: #{tpu_custom_call.1}
  #allocation0 [shape = 'u32[]', space=smem, size = 0x4, offset = 0x4, fixed_abs, tag = 'smem constant byte address 0x4 - core index']
  #allocation1 [shape = 'u32[144,128]{1,0:T(1,128)}', space=vmem, size = 0x12000, scoped, tag = 'internal scratch']
  %s0 = inlined_call_operand.vmem [shape: f32[2048,32], index: 0, kind: input, shape index: {}]
  %s1 = inlined_call_operand.vmem [shape: bf16[32,128], index: 1, kind: input, shape index: {}]
  %s2 = inlined_call_operand.vmem [shape: f32[1,128], index: 2, kind: input, shape index: {}]
  %s3 = inlined_call_operand.hbm [shape: f32[2048,128], index: 3, kind: output, shape index: {}]
  %s4 = sld [smem:[#allocation0]]
  $region45: #{tpu_custom_call.1} parent=0
    _
  %s6 = ssub.s32 1, %s4
  %s7 = scalar_select 0, %s6, %s4
  $region1: #{tpu_custom_call.1} parent=0
    #allocation2 [shape = 'u8[262144]{0}', space=vmem, size = 0x40000, scoped, tag = 'output window, operand 0']
    #allocation3 [shape = 's32[2]{0}', space=sflag, size = 0x8, scoped, tag = 'scoped memory for tpu_custom_call.1']
    %8 = vsyncpa [#allocation3], 0
    %s9 = scalar_lea.sflag [#allocation3], 1
    %10 = vsyncpa %s9, 0
    loop: start=0, step=1, limit=10
    $region2: #{tpu_custom_call.1} parent=1 // loop_pre_header
      _
    $region3: #{tpu_custom_call.1} parent=1 // loop_header
      %s12 = sphi 0, %s16
      %p13 = scmp.ge.s32.totalorder %s12, 10
      %s22 = sphi 0, %s24
      %s25 = sphi 0, %s22
      %s26 = sphi 0, %s25
      %s42 = sphi 0, %s26
      %s46 = sphi 0, %s46
      %s48 = sphi 0, %s46
      %s49 = sphi 0, %s48
      %s63 = sphi 0, %s49
      %s67 = sphi 0, %s67
      %s69 = sphi 0, %s67
      %s70 = sphi 0, %s69
      %s84 = sphi 0, %s70
      %s90 = sphi 0, %s92
      %s93 = sphi 0, %s90
      %s94 = sphi 0, %s93
      %s110 = sphi 0, %s94
    $region4: #{tpu_custom_call.1} parent=1 // loop_header_branch
      %15 = sbr.rel (%p13) target = $region8
    $region5: #{tpu_custom_call.1} parent=1 // loop_body
      %s17 = ssub.s32 %s12, 1
      %s18 = ssub.s32 %s12, 2
      %s19 = sadd.s32 %s12, 1
      %s20 = ssub.s32 %s12, %s19
      %p21 = scmp.eq.s32.totalorder %s20, 0
      %s23 = sadd.s32 %s22, 1
      %s24 = scalar_select %p21, %s22, %s23
      %p27 = pneg %p21
      %p28 = scmp.eq.s32.totalorder %s12, 7
      %p29 = por %p27, %p28
      %p30 = scmp.ne.s32.totalorder %s22, %s25
      %p31 = scmp.eq.s32.totalorder %s12, 0
      %p32 = por %p30, %p31
      %p33 = scmp.ne.s32.totalorder %s22, %s25
      %p34 = scmp.eq.s32.totalorder %s17, 7
      %p35 = por %p33, %p34
      %p36 = scmp.ne.s32.totalorder %s25, %s26
      %p37 = scmp.eq.s32.totalorder %s17, 0
      %p38 = por %p36, %p37
      %p39 = scmp.ne.s32.totalorder %s25, %s26
      %p40 = scmp.eq.s32.totalorder %s18, 7
      %p41 = por %p39, %p40
      %p43 = scmp.ne.s32.totalorder %s26, %s42
      %p44 = scmp.eq.s32.totalorder %s18, 0
      %p45 = por %p43, %p44
      %s47 = sadd.s32 %s46, 1
      %p50 = scmp.eq.s32.totalorder %s12, 7
      %p51 = scmp.ne.s32.totalorder %s46, %s48
      %p52 = scmp.eq.s32.totalorder %s12, 0
      %p53 = por %p51, %p52
      %p54 = scmp.ne.s32.totalorder %s46, %s48
      %p55 = scmp.eq.s32.totalorder %s17, 7
      %p56 = por %p54, %p55
      %p57 = scmp.ne.s32.totalorder %s48, %s49
      %p58 = scmp.eq.s32.totalorder %s17, 0
      %p59 = por %p57, %p58
      %p60 = scmp.ne.s32.totalorder %s48, %s49
      %p61 = scmp.eq.s32.totalorder %s18, 7
      %p62 = por %p60, %p61
      %p64 = scmp.ne.s32.totalorder %s49, %s63
      %p65 = scmp.eq.s32.totalorder %s18, 0
      %p66 = por %p64, %p65
      %s68 = sadd.s32 %s67, 1
      %p71 = scmp.eq.s32.totalorder %s12, 7
      %p72 = scmp.ne.s32.totalorder %s67, %s69
      %p73 = scmp.eq.s32.totalorder %s12, 0
      %p74 = por %p72, %p73
      %p75 = scmp.ne.s32.totalorder %s67, %s69
      %p76 = scmp.eq.s32.totalorder %s17, 7
      %p77 = por %p75, %p76
      %p78 = scmp.ne.s32.totalorder %s69, %s70
      %p79 = scmp.eq.s32.totalorder %s17, 0
      %p80 = por %p78, %p79
      %p81 = scmp.ne.s32.totalorder %s69, %s70
      %p82 = scmp.eq.s32.totalorder %s18, 7
      %p83 = por %p81, %p82
      %p85 = scmp.ne.s32.totalorder %s70, %s84
      %p86 = scmp.eq.s32.totalorder %s18, 0
      %p87 = por %p85, %p86
      %s88 = ssub.s32 %s12, %s19
      %p89 = scmp.eq.s32.totalorder %s88, 0
      %s91 = sadd.s32 %s90, 1
      %s92 = scalar_select %p89, %s90, %s91
      %p95 = pneg %p89
      %p96 = scmp.eq.s32.totalorder %s12, 7
      %p97 = por %p95, %p96
      %p98 = scmp.ne.s32.totalorder %s90, %s93
      %p99 = scmp.eq.s32.totalorder %s12, 0
      %p100 = por %p98, %p99
      %p101 = scmp.ne.s32.totalorder %s90, %s93
      %p102 = scmp.eq.s32.totalorder %s17, 7
      %p103 = por %p101, %p102
      %p104 = scmp.ne.s32.totalorder %s93, %s94
      %p105 = scmp.eq.s32.totalorder %s17, 0
      %p106 = por %p104, %p105
      %p107 = scmp.ne.s32.totalorder %s93, %s94
      %p108 = scmp.eq.s32.totalorder %s18, 7
      %p109 = por %p107, %p108
      %p111 = scmp.ne.s32.totalorder %s94, %s110
      %p112 = scmp.eq.s32.totalorder %s18, 0
      %p113 = por %p111, %p112
      %p114 = scmp.le.s32.totalorder 1, %s12
      %p115 = scmp.lt.s32.totalorder %s12, 9
      %p116 = pnand %p114, %p115
      %p117 = pneg %p116
      // Predicated region
      $region9: #{tpu_custom_call.1} parent=5 // pred_check
        _
      $region10: #{tpu_custom_call.1} parent=5 // pred_check_branch
        %119 = sbr.rel (%p116) target = $region12
      $region11: #{tpu_custom_call.1} parent=5 // pred_region
        %s120 = ssub.s32 %s12, 1
        // Predicated region
        $region13: #{tpu_custom_call.1} parent=11 // pred_check
          %p121 = pneg %p59
        $region14: #{tpu_custom_call.1} parent=11 // pred_check_branch
          %123 = sbr.rel (%p121) target = $region16
        $region15: #{tpu_custom_call.1} parent=11 // pred_region
          _
        $region16: #{tpu_custom_call.1} parent=11 // pred_fallthru
          _
        // Predicated region
        $region17: #{tpu_custom_call.1} parent=11 // pred_check
          %p124 = pneg %p80
        $region18: #{tpu_custom_call.1} parent=11 // pred_check_branch
          %126 = sbr.rel (%p124) target = $region20
        $region19: #{tpu_custom_call.1} parent=11 // pred_region
          _
        $region20: #{tpu_custom_call.1} parent=11 // pred_fallthru
          _
      $region12: #{tpu_custom_call.1} parent=5 // pred_fallthru
        _
      %p127 = scmp.lt.s32.totalorder %s12, 8
      // Predicated region
      $region21: #{tpu_custom_call.1} parent=5 // pred_check
        %p128 = pneg %p127
      $region22: #{tpu_custom_call.1} parent=5 // pred_check_branch
        %130 = sbr.rel (%p128) target = $region24
      $region23: #{tpu_custom_call.1} parent=5 // pred_region
        // Predicated region
        $region25: #{tpu_custom_call.1} parent=23 // pred_check
          %p131 = pneg %p32
        $region26: #{tpu_custom_call.1} parent=23 // pred_check_branch
          %133 = sbr.rel (%p131) target = $region28
        $region27: #{tpu_custom_call.1} parent=23 // pred_region
          %s134 = smul.u32 32, %s12
          %p135 = scmp.lt.s32.totalorder %s134, 255
          %s136 = scalar_select %p135, %s134, 255
          %s137 = smul.addr %s136, 8
          %s138 = scalar_lea.vmem %s0, %s137
          %s139 = smul.u32 32, %s12
        $region28: #{tpu_custom_call.1} parent=23 // pred_fallthru
          _
      $region24: #{tpu_custom_call.1} parent=5 // pred_fallthru
        _
      %p140 = scmp.le.s32.totalorder 1, %s12
      %p141 = scmp.lt.s32.totalorder %s12, 9
      %p142 = pnand %p140, %p141
      %p143 = pneg %p142
      // Predicated region
      $region29: #{tpu_custom_call.1} parent=5 // pred_check
        _
      $region30: #{tpu_custom_call.1} parent=5 // pred_check_branch
        %145 = sbr.rel (%p142) target = $region32
      $region31: #{tpu_custom_call.1} parent=5 // pred_region
        %s146 = ssub.s32 %s12, 1
        %s147 = smul.u32 32, %s17
        %p148 = scmp.lt.s32.totalorder %s147, 255
        %s149 = scalar_select %p148, %s147, 255
        %s150 = smul.addr %s149, 8
        %s151 = scalar_lea.vmem %s0, %s150
        %p152 = pneg %p38
        %p153 = pneg %p35
        %p154 = pneg %p59
        %p155 = pneg %p56
        %p156 = pneg %p80
        %p157 = pneg %p77
        %p158 = pneg %p106
        %p159 = pneg %p103
        %s160 = sand.u32 %s93, 1
        %s161 = scalar_lea.sflag [#allocation3], %s160
        %s162 = sand.u32 %s93, 1
        %s163 = smul.addr %s162, 256
        %s164 = scalar_lea.vmem [#allocation2], %s163
        %s165 = smul.u32 32, %s17
        %p166 = scmp.lt.s32.totalorder %s165, 255
        %s167 = scalar_select %p166, %s165, 255
        %s168 = smul.addr %s167, 8
        %s169 = scalar_lea.vmem %s0, %s168
        %s170 = smul.u32 32, %s17
        %s171 = smul.u32 32, %s17
        %v173 = vld [vmem:[%s169] sm:$0xff]
        %v174 = vld [vmem:[%s169 + $0x8] sm:$0xff]
        %v175 = vld [vmem:[%s169 + $0x10] sm:$0xff]
        %v176 = vld [vmem:[%s169 + $0x18] sm:$0xff]
        %v177 = vld [vmem:[%s169 + $0x20] sm:$0xff]
        %v178 = vld [vmem:[%s169 + $0x28] sm:$0xff]
        %v179 = vld [vmem:[%s169 + $0x30] sm:$0xff]
        %v180 = vld [vmem:[%s169 + $0x38] sm:$0xff]
        %v181 = vld [vmem:[%s169 + $0x40] sm:$0xff]
        %v182 = vld [vmem:[%s169 + $0x48] sm:$0xff]
        %v183 = vld [vmem:[%s169 + $0x50] sm:$0xff]
        %v184 = vld [vmem:[%s169 + $0x58] sm:$0xff]
        %v185 = vld [vmem:[%s169 + $0x60] sm:$0xff]
        %v186 = vld [vmem:[%s169 + $0x68] sm:$0xff]
        %v187 = vld [vmem:[%s169 + $0x70] sm:$0xff]
        %v188 = vld [vmem:[%s169 + $0x78] sm:$0xff]
        %v189 = vld [vmem:[%s169 + $0x80] sm:$0xff]
        %v190 = vld [vmem:[%s169 + $0x88] sm:$0xff]
        %v191 = vld [vmem:[%s169 + $0x90] sm:$0xff]
        %v192 = vld [vmem:[%s169 + $0x98] sm:$0xff]
        %v193 = vld [vmem:[%s169 + $0xa0] sm:$0xff]
        %v194 = vld [vmem:[%s169 + $0xa8] sm:$0xff]
        %v195 = vld [vmem:[%s169 + $0xb0] sm:$0xff]
        %v196 = vld [vmem:[%s169 + $0xb8] sm:$0xff]
        %v197 = vld [vmem:[%s169 + $0xc0] sm:$0xff]
        %v198 = vld [vmem:[%s169 + $0xc8] sm:$0xff]
        %v199 = vld [vmem:[%s169 + $0xd0] sm:$0xff]
        %v200 = vld [vmem:[%s169 + $0xd8] sm:$0xff]
        %v201 = vld [vmem:[%s169 + $0xe0] sm:$0xff]
        %v202 = vld [vmem:[%s169 + $0xe8] sm:$0xff]
        %v203 = vld [vmem:[%s169 + $0xf0] sm:$0xff]
        %v204 = vld [vmem:[%s169 + $0xf8] sm:$0xff]
        %v205 = vpack.c.bf16 %v174, %v173
        %v206 = vpack.c.bf16 %v176, %v175
        %v207 = vpack.c.bf16 %v178, %v177
        %v208 = vpack.c.bf16 %v180, %v179
        %v209 = vpack.c.bf16 %v182, %v181
        %v210 = vpack.c.bf16 %v184, %v183
        %v211 = vpack.c.bf16 %v186, %v185
        %v212 = vpack.c.bf16 %v188, %v187
        %v213 = vpack.c.bf16 %v190, %v189
        %v214 = vpack.c.bf16 %v192, %v191
        %v215 = vpack.c.bf16 %v194, %v193
        %v216 = vpack.c.bf16 %v196, %v195
        %v217 = vpack.c.bf16 %v198, %v197
        %v218 = vpack.c.bf16 %v200, %v199
        %v219 = vpack.c.bf16 %v202, %v201
        %v220 = vpack.c.bf16 %v204, %v203
        %v221 = vld [vmem:[%s1] sm:$0xf]
        %v222 = vld [vmem:[%s1 + $0x4] sm:$0xf]
        %v223 = vld [vmem:[%s1 + $0x8] sm:$0xf]
        %v224 = vld [vmem:[%s1 + $0xc] sm:$0xf]
        %v225 = vld [vmem:[%s2] sm:$0x1]
        %v227 = vlaneseq
        %v228 = vshrl.u32 %v227, 7
        %v229 = vsub.s32 0, %v228
        %v230 = vrot.slane %v225, %v229
        %v236 = vunpack.c.l.b16 %v221
        %v237 = vunpack.c.l.b16 %v222
        %v238 = vunpack.c.l.b16 %v223
        %v239 = vunpack.c.l.b16 %v224
        %v240 = vpack.c.b16 %v237, %v236
        %v241 = vpack.c.b16 %v239, %v238
        %vm244 = vcmask 261120
        %v246 = vsel %vm244, %v205, 0
        %v249 = vsel %vm244, %v206, 0
        %v252 = vsel %vm244, %v207, 0
        %v255 = vsel %vm244, %v208, 0
        %v258 = vsel %vm244, %v209, 0
        %v261 = vsel %vm244, %v210, 0
        %v264 = vsel %vm244, %v211, 0
        %v267 = vsel %vm244, %v212, 0
        %v270 = vsel %vm244, %v213, 0
        %v273 = vsel %vm244, %v214, 0
        %v276 = vsel %vm244, %v215, 0
        %v279 = vsel %vm244, %v216, 0
        %v282 = vsel %vm244, %v217, 0
        %v285 = vsel %vm244, %v218, 0
        %v288 = vsel %vm244, %v219, 0
        %v291 = vsel %vm244, %v220, 0
        %293 = vmatprep.subr.bf16.mxu0 0
        %294 = vmatpush1.bf16.msra.mxu0 0
        %295 = vmatprep.subr.bf16.mxu0 0
        %296 = vmatpush1.bf16.msra.mxu0 0
        %297 = vmatprep.subr.bf16.mxu0 0
        %298 = vmatpush1.bf16.msra.mxu0 0
        %299 = vmatprep.subr.bf16.mxu0 0
        %300 = vmatpush1.bf16.msra.mxu0 0
        %301 = vmatprep.subr.bf16.mxu0 0
        %302 = vmatpush1.bf16.msra.mxu0 0
        %303 = vmatprep.subr.bf16.mxu0 0
        %304 = vmatpush1.bf16.msra.mxu0 0
        %305 = vmatprep.subr.bf16.mxu0 0
        %306 = vmatpush1.bf16.msra.mxu0 %v241
        %307 = vmatprep.subr.bf16.mxu0 0
        %308 = vmatpush1.bf16.msra.mxu0 %v240
        %309 = vmatprep.subr.bf16.mxu0 0
        %310 = vmatpush2.bf16.msra.mxu0 0
        %311 = vmatprep.subr.bf16.mxu0 0
        %312 = vmatpush2.bf16.msra.mxu0 0
        %313 = vmatprep.subr.bf16.mxu0 0
        %314 = vmatpush2.bf16.msra.mxu0 0
        %315 = vmatprep.subr.bf16.mxu0 0
        %316 = vmatpush2.bf16.msra.mxu0 0
        %317 = vmatprep.subr.bf16.mxu0 0
        %318 = vmatpush2.bf16.msra.mxu0 0
        %319 = vmatprep.subr.bf16.mxu0 0
        %320 = vmatpush2.bf16.msra.mxu0 0
        %321 = vmatprep.subr.bf16.mxu0 0
        %322 = vmatpush2.bf16.msra.mxu0 0
        %323 = vmatprep.subr.bf16.mxu0 0
        %324 = vmatpush2.bf16.msra.mxu0 0
        %325 = vmatprep.mubr.bf16.mxu0 0
        %326 = vmatmul.mubr.bf16.gmra.mxu0 %v246
        %v327 = vpop.f32.mrf.mxu0
        %v328 = vadd.f32 %v230, %v327
        %v329 = vpop.f32.mrf.mxu0
        %v330 = vpop.f32.mrf.mxu0
        %v331 = vadd.f32 %v230, %v330
        %v332 = vpop.f32.mrf.mxu0
        %333 = vmatprep.mubr.bf16.mxu0 0
        %334 = vmatmul.mubr.bf16.gmra.mxu0 %v249
        %v335 = vpop.f32.mrf.mxu0
        %v336 = vadd.f32 %v230, %v335
        %v337 = vpop.f32.mrf.mxu0
        %v338 = vpop.f32.mrf.mxu0
        %v339 = vadd.f32 %v230, %v338
        %v340 = vpop.f32.mrf.mxu0
        %341 = vmatprep.mubr.bf16.mxu0 0
        %342 = vmatmul.mubr.bf16.gmra.mxu0 %v252
        %v343 = vpop.f32.mrf.mxu0
        %v344 = vadd.f32 %v230, %v343
        %v345 = vpop.f32.mrf.mxu0
        %v346 = vpop.f32.mrf.mxu0
        %v347 = vadd.f32 %v230, %v346
        %v348 = vpop.f32.mrf.mxu0
        %349 = vmatprep.mubr.bf16.mxu0 0
        %350 = vmatmul.mubr.bf16.gmra.mxu0 %v255
        %v351 = vpop.f32.mrf.mxu0
        %v352 = vadd.f32 %v230, %v351
        %v353 = vpop.f32.mrf.mxu0
        %v354 = vpop.f32.mrf.mxu0
        %v355 = vadd.f32 %v230, %v354
        %v356 = vpop.f32.mrf.mxu0
        %357 = vmatprep.mubr.bf16.mxu0 0
        %358 = vmatmul.mubr.bf16.gmra.mxu0 %v258
        %v359 = vpop.f32.mrf.mxu0
        %v360 = vadd.f32 %v230, %v359
        %v361 = vpop.f32.mrf.mxu0
        %v362 = vpop.f32.mrf.mxu0
        %v363 = vadd.f32 %v230, %v362
        %v364 = vpop.f32.mrf.mxu0
        %365 = vmatprep.mubr.bf16.mxu0 0
        %366 = vmatmul.mubr.bf16.gmra.mxu0 %v261
        %v367 = vpop.f32.mrf.mxu0
        %v368 = vadd.f32 %v230, %v367
        %v369 = vpop.f32.mrf.mxu0
        %v370 = vpop.f32.mrf.mxu0
        %v371 = vadd.f32 %v230, %v370
        %v372 = vpop.f32.mrf.mxu0
        %373 = vmatprep.mubr.bf16.mxu0 0
        %374 = vmatmul.mubr.bf16.gmra.mxu0 %v264
        %v375 = vpop.f32.mrf.mxu0
        %v376 = vadd.f32 %v230, %v375
        %v377 = vpop.f32.mrf.mxu0
        %v378 = vpop.f32.mrf.mxu0
        %v379 = vadd.f32 %v230, %v378
        %v380 = vpop.f32.mrf.mxu0
        %381 = vmatprep.mubr.bf16.mxu0 0
        %382 = vmatmul.mubr.bf16.gmra.mxu0 %v267
        %v383 = vpop.f32.mrf.mxu0
        %v384 = vadd.f32 %v230, %v383
        %v385 = vpop.f32.mrf.mxu0
        %v386 = vpop.f32.mrf.mxu0
        %v387 = vadd.f32 %v230, %v386
        %v388 = vpop.f32.mrf.mxu0
        %389 = vmatprep.mubr.bf16.mxu0 0
        %390 = vmatmul.mubr.bf16.gmra.mxu0 %v270
        %v391 = vpop.f32.mrf.mxu0
        %v392 = vadd.f32 %v230, %v391
        %v393 = vpop.f32.mrf.mxu0
        %v394 = vpop.f32.mrf.mxu0
        %v395 = vadd.f32 %v230, %v394
        %v396 = vpop.f32.mrf.mxu0
        %397 = vmatprep.mubr.bf16.mxu0 0
        %398 = vmatmul.mubr.bf16.gmra.mxu0 %v273
        %v399 = vpop.f32.mrf.mxu0
        %v400 = vadd.f32 %v230, %v399
        %v401 = vpop.f32.mrf.mxu0
        %v402 = vpop.f32.mrf.mxu0
        %v403 = vadd.f32 %v230, %v402
        %v404 = vpop.f32.mrf.mxu0
        %405 = vmatprep.mubr.bf16.mxu0 0
        %406 = vmatmul.mubr.bf16.gmra.mxu0 %v276
        %v407 = vpop.f32.mrf.mxu0
        %v408 = vadd.f32 %v230, %v407
        %v409 = vpop.f32.mrf.mxu0
        %v410 = vpop.f32.mrf.mxu0
        %v411 = vadd.f32 %v230, %v410
        %v412 = vpop.f32.mrf.mxu0
        %413 = vmatprep.mubr.bf16.mxu0 0
        %414 = vmatmul.mubr.bf16.gmra.mxu0 %v279
        %v415 = vpop.f32.mrf.mxu0
        %v416 = vadd.f32 %v230, %v415
        %v417 = vpop.f32.mrf.mxu0
        %v418 = vpop.f32.mrf.mxu0
        %v419 = vadd.f32 %v230, %v418
        %v420 = vpop.f32.mrf.mxu0
        %421 = vmatprep.mubr.bf16.mxu0 0
        %422 = vmatmul.mubr.bf16.gmra.mxu0 %v282
        %v423 = vpop.f32.mrf.mxu0
        %v424 = vadd.f32 %v230, %v423
        %v425 = vpop.f32.mrf.mxu0
        %v426 = vpop.f32.mrf.mxu0
        %v427 = vadd.f32 %v230, %v426
        %v428 = vpop.f32.mrf.mxu0
        %429 = vmatprep.mubr.bf16.mxu0 0
        %430 = vmatmul.mubr.bf16.gmra.mxu0 %v285
        %v431 = vpop.f32.mrf.mxu0
        %v432 = vadd.f32 %v230, %v431
        %v433 = vpop.f32.mrf.mxu0
        %v434 = vpop.f32.mrf.mxu0
        %v435 = vadd.f32 %v230, %v434
        %v436 = vpop.f32.mrf.mxu0
        %437 = vmatprep.mubr.bf16.mxu0 0
        %438 = vmatmul.mubr.bf16.gmra.mxu0 %v288
        %v439 = vpop.f32.mrf.mxu0
        %v440 = vadd.f32 %v230, %v439
        %v441 = vpop.f32.mrf.mxu0
        %v442 = vpop.f32.mrf.mxu0
        %v443 = vadd.f32 %v230, %v442
        %v444 = vpop.f32.mrf.mxu0
        %445 = vmatprep.mubr.bf16.mxu0 0
        %446 = vmatmul.mubr.bf16.gmra.mxu0 %v291
        %v447 = vpop.f32.mrf.mxu0
        %v448 = vadd.f32 %v230, %v447
        %v449 = vpop.f32.mrf.mxu0
        %v450 = vpop.f32.mrf.mxu0
        %v451 = vadd.f32 %v230, %v450
        %v452 = vpop.f32.mrf.mxu0
        %453 = vdwg.mxu0
        %v454 = vmax.f32 %v328, 0.0
        %v455 = vmax.f32 %v331, 0.0
        %v456 = vmax.f32 %v336, 0.0
        %v457 = vmax.f32 %v339, 0.0
        %v458 = vmax.f32 %v344, 0.0
        %v459 = vmax.f32 %v347, 0.0
        %v460 = vmax.f32 %v352, 0.0
        %v461 = vmax.f32 %v355, 0.0
        %v462 = vmax.f32 %v360, 0.0
        %v463 = vmax.f32 %v363, 0.0
        %v464 = vmax.f32 %v368, 0.0
        %v465 = vmax.f32 %v371, 0.0
        %v466 = vmax.f32 %v376, 0.0
        %v467 = vmax.f32 %v379, 0.0
        %v468 = vmax.f32 %v384, 0.0
        %v469 = vmax.f32 %v387, 0.0
        %v470 = vmax.f32 %v392, 0.0
        %v471 = vmax.f32 %v395, 0.0
        %v472 = vmax.f32 %v400, 0.0
        %v473 = vmax.f32 %v403, 0.0
        %v474 = vmax.f32 %v408, 0.0
        %v475 = vmax.f32 %v411, 0.0
        %v476 = vmax.f32 %v416, 0.0
        %v477 = vmax.f32 %v419, 0.0
        %v478 = vmax.f32 %v424, 0.0
        %v479 = vmax.f32 %v427, 0.0
        %v480 = vmax.f32 %v432, 0.0
        %v481 = vmax.f32 %v435, 0.0
        %v482 = vmax.f32 %v440, 0.0
        %v483 = vmax.f32 %v443, 0.0
        %v484 = vmax.f32 %v448, 0.0
        %v485 = vmax.f32 %v451, 0.0
        %486 = vst [vmem:[%s164] sm:$0xff] %v454
        %487 = vst [vmem:[%s164 + $0x8] sm:$0xff] %v455
        %488 = vst [vmem:[%s164 + $0x10] sm:$0xff] %v456
        %489 = vst [vmem:[%s164 + $0x18] sm:$0xff] %v457
        %490 = vst [vmem:[%s164 + $0x20] sm:$0xff] %v458
        %491 = vst [vmem:[%s164 + $0x28] sm:$0xff] %v459
        %492 = vst [vmem:[%s164 + $0x30] sm:$0xff] %v460
        %493 = vst [vmem:[%s164 + $0x38] sm:$0xff] %v461
        %494 = vst [vmem:[%s164 + $0x40] sm:$0xff] %v462
        %495 = vst [vmem:[%s164 + $0x48] sm:$0xff] %v463
        %496 = vst [vmem:[%s164 + $0x50] sm:$0xff] %v464
        %497 = vst [vmem:[%s164 + $0x58] sm:$0xff] %v465
        %498 = vst [vmem:[%s164 + $0x60] sm:$0xff] %v466
        %499 = vst [vmem:[%s164 + $0x68] sm:$0xff] %v467
        %500 = vst [vmem:[%s164 + $0x70] sm:$0xff] %v468
        %501 = vst [vmem:[%s164 + $0x78] sm:$0xff] %v469
        %502 = vst [vmem:[%s164 + $0x80] sm:$0xff] %v470
        %503 = vst [vmem:[%s164 + $0x88] sm:$0xff] %v471
        %504 = vst [vmem:[%s164 + $0x90] sm:$0xff] %v472
        %505 = vst [vmem:[%s164 + $0x98] sm:$0xff] %v473
        %506 = vst [vmem:[%s164 + $0xa0] sm:$0xff] %v474
        %507 = vst [vmem:[%s164 + $0xa8] sm:$0xff] %v475
        %508 = vst [vmem:[%s164 + $0xb0] sm:$0xff] %v476
        %509 = vst [vmem:[%s164 + $0xb8] sm:$0xff] %v477
        %510 = vst [vmem:[%s164 + $0xc0] sm:$0xff] %v478
        %511 = vst [vmem:[%s164 + $0xc8] sm:$0xff] %v479
        %512 = vst [vmem:[%s164 + $0xd0] sm:$0xff] %v480
        %513 = vst [vmem:[%s164 + $0xd8] sm:$0xff] %v481
        %514 = vst [vmem:[%s164 + $0xe0] sm:$0xff] %v482
        %515 = vst [vmem:[%s164 + $0xe8] sm:$0xff] %v483
        %516 = vst [vmem:[%s164 + $0xf0] sm:$0xff] %v484
        %517 = vst [vmem:[%s164 + $0xf8] sm:$0xff] %v485
        %s518 = sand.u32 %s93, 1
        %s519 = scalar_lea.sflag [#allocation3], %s518
        %s520 = sand.u32 %s93, 1
        %s521 = smul.addr %s520, 256
        %s522 = scalar_lea.vmem [#allocation2], %s521
        // Predicated region
        $region33: #{tpu_custom_call.1} parent=31 // pred_check
          %p523 = pneg %p103
        $region34: #{tpu_custom_call.1} parent=31 // pred_check_branch
          %525 = sbr.rel (%p523) target = $region36
        $region35: #{tpu_custom_call.1} parent=31 // pred_region
          %s526 = smul.u32 32, %s17
          %s528 = ssub.s32 4096, 4096
          %529 = vsyncadd %s519, %s528
          %s530 = smul.addr %s526, 128
          %s531 = scalar_lea.hbm %s3, %s530
          %s532 = sshll.u32 %s522, 4
          %s533 = int_to_ptr.vmem [resolvable:$true] %s532
          %538 = dma.vmem_to_hbm [thread:$0]  %s533, 4096, %s531, %s519, 128, 128, 8
        $region36: #{tpu_custom_call.1} parent=31 // pred_fallthru
          _
      $region32: #{tpu_custom_call.1} parent=5 // pred_fallthru
        _
      %p539 = scmp.le.s32.totalorder 2, %s12
      // Predicated region
      $region37: #{tpu_custom_call.1} parent=5 // pred_check
        %p540 = pneg %p539
      $region38: #{tpu_custom_call.1} parent=5 // pred_check_branch
        %542 = sbr.rel (%p540) target = $region40
      $region39: #{tpu_custom_call.1} parent=5 // pred_region
        %s543 = ssub.s32 %s12, 2
        // Predicated region
        $region41: #{tpu_custom_call.1} parent=39 // pred_check
          %p544 = pneg %p109
        $region42: #{tpu_custom_call.1} parent=39 // pred_check_branch
          %546 = sbr.rel (%p544) target = $region44
        $region43: #{tpu_custom_call.1} parent=39 // pred_region
          %s547 = sand.u32 %s94, 1
          %s548 = scalar_lea.sflag [#allocation3], %s547
          %s549 = sand.u32 %s94, 1
          %s550 = smul.addr %s549, 256
          %s551 = scalar_lea.vmem [#allocation2], %s550
          %552 = dma.done %s548, 4096
        $region44: #{tpu_custom_call.1} parent=39 // pred_fallthru
          _
      $region40: #{tpu_custom_call.1} parent=5 // pred_fallthru
        _
    $region6: #{tpu_custom_call.1} parent=1 // loop_footer
      %s16 = sadd.s32 1, %s12
    $region7: #{tpu_custom_call.1} parent=1 // loop_footer_branch
      %11 = sbr.rel target = $region3
    $region8: #{tpu_custom_call.1} parent=1 // loop_exit
      _
    %553 = vsyncpa [#allocation3], 1
    %s554 = scalar_lea.sflag [#allocation3], 1
    %555 = vsyncpa %s554, 1

</llo_original>
